<compile_context>
chip_gen: v6e
topology: v6e:2x2x1
jax: 0.10.0
libtpu: 0.0.40
codegen_flags: <defaults>
</compile_context>

<pallas_src>
import functools

import jax
import jax.numpy as jnp
from jax import lax
from jax.experimental import pallas as pl
from jax.experimental.pallas import tpu as pltpu


_VMEM = pl.BlockSpec(memory_space=pltpu.MemorySpace.VMEM)


# --------------------------------------------------------------------------
# Kernel 1: Laplacian  L = D - A + eps*I, tiled over row blocks.
# --------------------------------------------------------------------------
def _laplacian_kernel(adj_ref, L_ref, *, rows_per_block):
    i = pl.program_id(0)
    adj = adj_ref[...]                                    # [tm, N] f32
    tm, n = adj.shape
    deg = jnp.sum(adj, axis=1, keepdims=True)             # [tm, 1]
    row = lax.broadcasted_iota(jnp.int32, (tm, n), 0) + i * rows_per_block
    col = lax.broadcasted_iota(jnp.int32, (tm, n), 1)
    # Fused diagonal: no eye / no extra N^2 temporaries.
    L_ref[...] = jnp.where(row == col, deg + 1e-5 - adj, -adj)


def _lap_row_tile(n, block_budget_bytes=6 * 1024 * 1024):
    """Rows per (tm, N) f32 block, targeting ~6 MiB per block (input+output
    double-buffering is ~4x the block).  No untiled fallback: rows are padded to
    a multiple of tm in the wrapper and sliced off afterwards."""
    if n * n * 4 <= block_budget_bytes:
        return n                                          # whole matrix = one block
    tm = block_budget_bytes // (4 * n)
    tm = max(8, min(1024, (tm // 8) * 8))
    return tm


def _laplacian(adj, n):
    tm = _lap_row_tile(n)
    n_rows = ((n + tm - 1) // tm) * tm
    if n_rows != n:
        adj = jnp.pad(adj, ((0, n_rows - n), (0, 0)))
    L_pad = pl.pallas_call(
        functools.partial(_laplacian_kernel, rows_per_block=tm),
        out_shape=jax.ShapeDtypeStruct((n_rows, n), jnp.float32),
        grid=(n_rows // tm,),
        in_specs=[pl.BlockSpec((tm, n), lambda i: (i, 0))],
        out_specs=pl.BlockSpec((tm, n), lambda i: (i, 0)),
        compiler_params=pltpu.CompilerParams(
            dimension_semantics=("parallel",),
            vmem_limit_bytes=48 * 1024 * 1024),
    )(adj)
    return L_pad[:n]


# --------------------------------------------------------------------------
# Kernel 2: cluster-attention softmax -> combined mask -> binary threshold.
#           (tiny: [num_clusters, N]-scale data; threshold math stays f32)
# --------------------------------------------------------------------------
def _mask_kernel(attn_ref, masks_ref, bin_ref, *, num_valid):
    a = attn_ref[...]                                     # [1, num_clusters]
    a = a - jnp.max(a, axis=-1, keepdims=True)
    e = jnp.exp(a)
    w = e / jnp.sum(e, axis=-1, keepdims=True)            # softmax over clusters
    m = jnp.dot(w, masks_ref[...],
                preferred_element_type=jnp.float32)       # [1, N_pad]
    # Padded columns are zero, so sum(m) == sum over the real N nodes.
    thr = jnp.sum(m) / num_valid
    col = lax.broadcasted_iota(jnp.int32, m.shape, 1)
    bin_ref[...] = jnp.where((m > thr) & (col < num_valid), 1.0, 0.0)


def _combined_binary_mask(attn_row, cluster_masks_pad, n_valid):
    n_pad = cluster_masks_pad.shape[1]
    return pl.pallas_call(
        functools.partial(_mask_kernel, num_valid=n_valid),
        out_shape=jax.ShapeDtypeStruct((1, n_pad), jnp.float32),
        in_specs=[_VMEM, _VMEM],
        out_specs=_VMEM,
    )(attn_row, cluster_masks_pad)


# --------------------------------------------------------------------------
# Kernel 3: fused, N-tiled accumulation of
#           C = Uk^T diag(binary) Uk   and   G = Uk^T H
#           (bf16 streams, f32 scratch accumulators, "arbitrary" reduction axis)
# --------------------------------------------------------------------------
def _gram_proj_kernel(ukT_ref, uk_ref, bin_ref, H_ref, C_ref, G_ref, c_acc, g_acc):
    step = pl.program_id(0)

    @pl.when(step == 0)
    def _():
        c_acc[...] = jnp.zeros_like(c_acc)
        g_acc[...] = jnp.zeros_like(g_acc)

    ukT = ukT_ref[...]                                    # [K, T]
    masked = ukT * bin_ref[...]                           # [K, T]  (binary is 0/1)
    # Natural matmul form (LHS lane contraction, RHS sublane) -> no XLU transpose.
    c_acc[...] += jnp.dot(masked, uk_ref[...], preferred_element_type=jnp.float32)
    g_acc[...] += jnp.dot(ukT, H_ref[...], preferred_element_type=jnp.float32)

    @pl.when(step == pl.num_programs(0) - 1)
    def _():
        C_ref[...] = c_acc[...]
        G_ref[...] = g_acc[...]


def _gram_and_projection(ukT, uk, binary, H_pad, tile_n):
    k, n_pad = ukT.shape
    cin = H_pad.shape[1]
    return pl.pallas_call(
        _gram_proj_kernel,
        out_shape=(jax.ShapeDtypeStruct((k, k), jnp.float32),
                   jax.ShapeDtypeStruct((k, cin), jnp.float32)),
        grid=(n_pad // tile_n,),
        in_specs=[pl.BlockSpec((k, tile_n), lambda i: (0, i)),
                  pl.BlockSpec((tile_n, k), lambda i: (i, 0)),
                  pl.BlockSpec((1, tile_n), lambda i: (0, i)),
                  pl.BlockSpec((tile_n, cin), lambda i: (i, 0))],
        out_specs=(pl.BlockSpec((k, k), lambda i: (0, 0)),
                   pl.BlockSpec((k, cin), lambda i: (0, 0))),
        scratch_shapes=[pltpu.VMEM((k, k), jnp.float32),
                        pltpu.VMEM((k, cin), jnp.float32)],
        compiler_params=pltpu.CompilerParams(
            dimension_semantics=("arbitrary",),
            vmem_limit_bytes=32 * 1024 * 1024),
    )(ukT, uk, binary, H_pad)


# --------------------------------------------------------------------------
# Kernel 4: per-slepian MLP collapsed to two block-diagonal MXU matmuls.
#   h  = flatten(H_slep) = sum_j s_rep * G_rep          (VPU mul + sublane reduce)
#   h1 = relu(h @ W1_blk);  h2 = relu(h1 * W2_rowsum);  hf = h2 @ W3_blk
# --------------------------------------------------------------------------
def _slepian_mlp_kernel(srep_ref, grep_ref, w1_ref, w2s_ref, w3_ref, hf_ref):
    # h[0, k*Cin + i] = sum_j s[j, k] * G[j, i]  ==  flatten(s^T @ (Uk^T H))
    h = jnp.sum(srep_ref[...] * grep_ref[...], axis=0, keepdims=True)   # [1, K*Cin]
    h1 = jnp.maximum(jnp.dot(h, w1_ref[...],
                             preferred_element_type=jnp.float32), 0.0)  # [1, K*hid]
    # einsum('kch,kc->kc', W2, H1) == H1 * sum_h W2[k,c,h]  (row sums precomputed)
    h2 = jnp.maximum(h1 * w2s_ref[...], 0.0)                            # [1, K*hid]
    hf_ref[...] = jnp.dot(h2, w3_ref[...],
                          preferred_element_type=jnp.float32)           # [1, K*out]


def _slepian_mlp(s_rep, g_rep, W1_blk, W2s_flat, W3_blk):
    ko = W3_blk.shape[1]
    return pl.pallas_call(
        _slepian_mlp_kernel,
        out_shape=jax.ShapeDtypeStruct((1, ko), jnp.float32),
        in_specs=[_VMEM] * 5,
        out_specs=_VMEM,
    )(s_rep, g_rep, W1_blk, W2s_flat, W3_blk)


# --------------------------------------------------------------------------
# Kernel 5: back-projection  H_out^T = (Uk @ s @ H_filtered)^T
#           N-tiled, "parallel" (megacore), lane-dense [out, tile_N] stores.
# --------------------------------------------------------------------------
def _backproject_kernel(s_ref, hf_ref, ukT_ref, outT_ref):
    # F = s @ H_filtered : tiny, recomputed per tile so the grid axis stays parallel.
    F = jnp.dot(s_ref[...], hf_ref[...], preferred_element_type=jnp.float32)  # [K, out]
    outT_ref[...] = lax.dot_general(
        F.astype(ukT_ref.dtype), ukT_ref[...],
        dimension_numbers=(((0,), (0,)), ((), ())),
        preferred_element_type=jnp.float32)                                   # [out, T]


def _backproject(s, Hf, ukT, tile_n):
    k, n_pad = ukT.shape
    out_c = Hf.shape[1]
    return pl.pallas_call(
        _backproject_kernel,
        out_shape=jax.ShapeDtypeStruct((out_c, n_pad), jnp.float32),
        grid=(n_pad // tile_n,),
        in_specs=[pl.BlockSpec((k, k), lambda i: (0, 0)),
                  pl.BlockSpec((k, out_c), lambda i: (0, 0)),
                  pl.BlockSpec((k, tile_n), lambda i: (0, i))],
        out_specs=pl.BlockSpec((out_c, tile_n), lambda i: (0, i)),
        compiler_params=pltpu.CompilerParams(
            dimension_semantics=("parallel",),
            vmem_limit_bytes=32 * 1024 * 1024),
    )(s, Hf, ukT)


# --------------------------------------------------------------------------
# Helpers
# --------------------------------------------------------------------------
def _slep_tile(n, k, cin, out_c, comp_bytes, budget_bytes=8 * 1024 * 1024,
               min_tile=512, max_tile=8192):
    """N-tile + padded N for the projection / back-projection kernels.  Small
    graphs run as one full block; large graphs use a lane-aligned (multiple of
    128) tile sized so double-buffered inputs+outputs stay inside scoped VMEM."""
    if n <= min_tile:
        return n, n
    per_col = 2 * ((2 * k + cin + 1) * comp_bytes + k * comp_bytes + out_c * 4)
    t = budget_bytes // max(per_col, 1)
    t = max(min_tile, min(max_tile, (t // 128) * 128))
    t = min(t, ((n + 127) // 128) * 128)
    n_pad = ((n + t - 1) // t) * t
    return t, n_pad


def _block_diag(W):
    """[K, a, b] -> block-diagonal [K*a, K*b] with W[k] on the k-th diagonal block."""
    kk, a, b = W.shape
    eye = jnp.eye(kk, dtype=W.dtype)
    return jnp.einsum('kab,kl->kalb', W, eye).reshape(kk * a, kk * b)


# --------------------------------------------------------------------------
# Forward pass
# --------------------------------------------------------------------------
def sleplayer_energy_forward(H, edge_index, W1, W2, W3,
                             cluster_attention, cluster_masks, *, num_slepians,
                             compute_dtype=jnp.bfloat16):
    """JAX/Pallas equivalent of Sleplayer_Energy.forward.

    compute_dtype: dtype for the large N-streamed operands (Uk / Uk^T / H / mask)
    of the projection kernels; contractions always accumulate in f32.
    """
    n, in_channels = H.shape
    k = num_slepians
    hid = W1.shape[-1]
    out_c = W3.shape[-1]

    # to_dense_adj(edge_index)[0]  (glue: scatter-add on the dense adjacency)
    adj = jnp.zeros((n, n), jnp.float32).at[edge_index[0], edge_index[1]].add(1.0)

    # Kernel 1: Laplacian (row-tiled, megacore-parallel, ~6 MiB blocks)
    L = _laplacian(adj, n)

    # TODO(synk): eigendecomposition has no Pallas equivalent; plain JAX eigh.
    _, U = jnp.linalg.eigh(L)
    uk = U[:, :k].astype(jnp.float32)                      # [N, K]

    # --- N padding + lane-dense low-precision slabs for the N-streamed kernels
    comp_bytes = jnp.dtype(compute_dtype).itemsize
    tile_n, n_pad = _slep_tile(n, k, in_channels, out_c, comp_bytes)
    pad = n_pad - n
    uk_p = jnp.pad(uk, ((0, pad), (0, 0)))                 # [N_pad, K]
    ukT_p = uk_p.T                                         # [K, N_pad] lane-dense
    H_p = jnp.pad(H.astype(jnp.float32), ((0, pad), (0, 0)))
    masks_p = jnp.pad(cluster_masks.astype(jnp.float32), ((0, 0), (0, pad)))

    # Kernel 2: combined cluster mask + binary threshold (f32 threshold math)
    attn_row = cluster_attention.astype(jnp.float32).reshape(1, -1)
    binary = _combined_binary_mask(attn_row, masks_p, n)   # [1, N_pad] f32

    # Kernel 3: fused C = Uk^T S Uk and G = Uk^T H, accumulated over N tiles.
    ukT_c = ukT_p.astype(compute_dtype)
    uk_c = uk_p.astype(compute_dtype)
    H_c = H_p.astype(compute_dtype)
    bin_c = binary.astype(compute_dtype)                   # exact: values are 0/1
    C, G = _gram_and_projection(ukT_c, uk_c, bin_c, H_c, tile_n)

    # second (tiny) eigendecomposition; s[:, :K] == s since C is K x K.
    _, s = jnp.linalg.eigh(C)
    s = s.astype(jnp.float32)

    # --- wrapper-side layout plumbing for the block-diagonal MLP (no in-kernel
    #     reshapes): block-diag weights, W2 row sums, repeated/tiled s and G.
    W1_blk = _block_diag(W1.astype(jnp.float32))           # [K*Cin, K*hid]
    W3_blk = _block_diag(W3.astype(jnp.float32))           # [K*hid, K*out]
    W2s_flat = jnp.sum(W2.astype(jnp.float32), axis=2).reshape(1, k * hid)
    s_rep = jnp.repeat(s, in_channels, axis=1)             # [K, K*Cin]
    g_rep = jnp.tile(G, (1, k))                            # [K, K*Cin]

    # Kernel 4: per-slepian MLP as two block-diagonal MXU matmuls.
    hf = _slepian_mlp(s_rep, g_rep, W1_blk, W2s_flat, W3_blk)   # [1, K*out]
    Hf = hf.reshape(k, out_c)                              # [K, out]

    # Kernel 5: back-projection (N-tiled, parallel, lane-dense [out, N] stores).
    outT = _backproject(s, Hf, ukT_c, tile_n)              # [out, N_pad]
    return outT[:, :n].T                                   # [N, out]


# --------------------------------------------------------------------------
# Demo
# --------------------------------------------------------------------------
if __name__ == "__main__":
    num_nodes = 16
    num_clusters = 4
    num_slepians = 4
    in_channels = 8
    hidden_dim = 16
    out_channels = 8

    key = jax.random.PRNGKey(0)
    k1, k2, k3, k4, k5, k6 = jax.random.split(key, 6)
    W1 = jax.random.normal(k1, (num_slepians, in_channels, hidden_dim), jnp.float32)
    W2 = jax.random.normal(k2, (num_slepians, hidden_dim, hidden_dim), jnp.float32)
    W3 = jax.random.normal(k3, (num_slepians, hidden_dim, out_channels), jnp.float32)
    cluster_attention = jax.random.normal(k4, (num_clusters, 1), jnp.float32)
    cluster_masks = jax.random.uniform(k5, (num_clusters, num_nodes), jnp.float32)
    H = jax.random.normal(k6, (num_nodes, in_channels), jnp.float32)

    # deterministic ring graph, both directions
    src = jnp.arange(num_nodes, dtype=jnp.int32)
    dst = (src + 1) % num_nodes
    edge_index = jnp.stack([jnp.concatenate([src, dst]),
                            jnp.concatenate([dst, src])], axis=0)

    H_out = sleplayer_energy_forward(H, edge_index, W1, W2, W3,
                                     cluster_attention, cluster_masks,
                                     num_slepians=num_slepians)
    H_out = jax.block_until_ready(H_out)

    assert H_out.shape == (num_nodes, out_channels), H_out.shape
    assert bool(jnp.all(jnp.isfinite(H_out)))
    print("KERNEL_OK")
</pallas_src>

<mosaic_0001>
module attributes {stable_mosaic.version = 11 : i64} {
  func.func @_laplacian_kernel(%arg0: i32, %arg1: memref<16x16xf32, #tpu.memory_space<vmem>>, %arg2: memref<16x16xf32, #tpu.memory_space<vmem>>) attributes {dimension_semantics = [#tpu.dimension_semantics<parallel>], iteration_bounds = array<i64: 1>, scalar_prefetch = 0 : i64, scratch_operands = 0 : i64, tpu.core_type = #tpu.core_type<tc>, window_params = [{transform_indices = @transform_0, window_bounds = array<i64: 16, 16>}, {transform_indices = @transform_1, window_bounds = array<i64: 16, 16>}]} {
    %c0 = arith.constant 0 : index
    %c0_0 = arith.constant 0 : index
    %0 = vector.load %arg1[%c0, %c0_0] : memref<16x16xf32, #tpu.memory_space<vmem>>, vector<16x16xf32>
    %cst = arith.constant dense<0.000000e+00> : vector<16xf32>
    %1 = vector.multi_reduction <add>, %0, %cst [1] : vector<16x16xf32> to vector<16xf32>
    %2 = vector.shape_cast %1 : vector<16xf32> to vector<16x1xf32>
    %3 = tpu.iota {dimensions = array<i32: 0>} : vector<16x16xi32>
    %c16_i32 = arith.constant 16 : i32
    %4 = arith.muli %arg0, %c16_i32 : i32
    %5 = vector.broadcast %4 : i32 to vector<16x16xi32>
    %6 = arith.addi %3, %5 : vector<16x16xi32>
    %7 = tpu.iota {dimensions = array<i32: 1>} : vector<16x16xi32>
    %8 = arith.cmpi eq, %6, %7 : vector<16x16xi32>
    %cst_1 = arith.constant 9.99999974E-6 : f32
    %9 = vector.broadcast %cst_1 : f32 to vector<16x1xf32>
    %10 = arith.addf %2, %9 : vector<16x1xf32>
    %11 = vector.broadcast %10 : vector<16x1xf32> to vector<16x16xf32>
    %12 = arith.subf %11, %0 : vector<16x16xf32>
    %cst_2 = arith.constant 0.000000e+00 : f32
    %13 = vector.broadcast %cst_2 : f32 to vector<16x16xf32>
    %14 = arith.subf %13, %0 : vector<16x16xf32>
    %15 = arith.select %8, %12, %14 : vector<16x16xi1>, vector<16x16xf32>
    %c0_3 = arith.constant 0 : index
    %c0_4 = arith.constant 0 : index
    %16 = vector.load %arg2[%c0_3, %c0_4] : memref<16x16xf32, #tpu.memory_space<vmem>>, vector<16x16xf32>
    tpu.vector_store %arg2[%c0_3, %c0_4], %15 {strides = array<i32>} : memref<16x16xf32, #tpu.memory_space<vmem>>, vector<16x16xf32>,
    return
  }
  func.func @transform_0(%arg0: i32) -> (i32, i32) {
    %c0_i32 = arith.constant 0 : i32
    %c0_i32_0 = arith.constant 0 : i32
    return %arg0, %c0_i32 : i32, i32
  }
  func.func @transform_1(%arg0: i32) -> (i32, i32) {
    %c0_i32 = arith.constant 0 : i32
    %c0_i32_0 = arith.constant 0 : i32
    return %arg0, %c0_i32 : i32, i32
  }
}

</mosaic_0001>

<llo_original>
// kernel: tpu_custom_call.1
$region0: #{tpu_custom_call.1}
  #allocation0 [shape = 'u32[]', space=smem, size = 0x4, offset = 0x4, fixed_abs, tag = 'smem constant byte address 0x4 - core index']
  #allocation1 [shape = 'u32[144,128]{1,0:T(1,128)}', space=vmem, size = 0x12000, scoped, tag = 'internal scratch']
  %s0 = inlined_call_operand.hbm [shape: f32[16,16], index: 0, kind: input, shape index: {}]
  %s1 = inlined_call_operand.hbm [shape: f32[16,16], index: 1, kind: output, shape index: {}]
  %s2 = sld [smem:[#allocation0]]
  $region18: #{tpu_custom_call.1} parent=0
    _
  %s4 = ssub.s32 1, %s2
  %s5 = scalar_select 0, %s4, %s2
  $region1: #{tpu_custom_call.1} parent=0
    #allocation2 [shape = 'u8[8192]{0}', space=vmem, size = 0x2000, scoped, tag = 'input window, operand 0, single buffered']
    #allocation3 [shape = 's32[1]{0}', space=sflag, size = 0x4, scoped, tag = 'scoped memory for tpu_custom_call.1']
    #allocation4 [shape = 's32[1]{0}', space=sflag, size = 0x4, scoped, tag = 'scoped memory for tpu_custom_call.1']
    #allocation5 [shape = 'u8[8192]{0}', space=vmem, size = 0x2000, scoped, tag = 'output window, operand 0, single buffered']
    %6 = vsyncpa [#allocation3], 0
    %7 = vsyncpa [#allocation4], 0
    // Predicated region
    $region2: #{tpu_custom_call.1} parent=1 // pred_check
      _
    $region3: #{tpu_custom_call.1} parent=1 // pred_check_branch
      %9 = sbr.rel (0) target = $region5
    $region4: #{tpu_custom_call.1} parent=1 // pred_region
      %s11 = ssub.s32 256, 256
      %12 = vsyncadd [#allocation3], %s11
      %s13 = sshll.u32 [#allocation2], 4
      %s14 = int_to_ptr.vmem [resolvable:$true] %s13
      %19 = dma.hbm_to_vmem [thread:$0]  %s0, 256, %s14, [#allocation3], 128, 128, 8
    $region5: #{tpu_custom_call.1} parent=1 // pred_fallthru
      _
    // Predicated region
    $region6: #{tpu_custom_call.1} parent=1 // pred_check
      _
    $region7: #{tpu_custom_call.1} parent=1 // pred_check_branch
      %21 = sbr.rel (0) target = $region9
    $region8: #{tpu_custom_call.1} parent=1 // pred_region
      %22 = dma.done [#allocation3], 256
    $region9: #{tpu_custom_call.1} parent=1 // pred_fallthru
      _
    %v23 = vld [vmem:[#allocation2] sm:$0xff]
    %v24 = vld [vmem:[#allocation2 + $0x8] sm:$0xff]
    %vm25 = vcmask 130048
    %v26 = vsel %vm25, %v23, 0.0
    %27 = vadd.xlane.f32.xlu0 %v26
    %v28 = vpop.xlane.xlu0 %27
    %v29 = vsel %vm25, %v24, 0.0
    %30 = vadd.xlane.f32.xlu0 %v29
    %v31 = vpop.xlane.xlu0 %30
    %v32 = vlaneseq
    %v33 = vshrl.u32 %v32, 7
    %v34 = vadd.s32 %v33, 8
    %s35 = smul.u32 0, 16
    %v36 = vstv %s35
    %v37 = vadd.s32 %v33, %v36
    %v38 = vadd.s32 %v34, %v36
    %v39 = vlaneseq
    %v40 = vand.u32 %v39, 127
    %vm41 = vcmp.eq.s32.totalorder %v37, %v40
    %vm42 = vcmp.eq.s32.totalorder %v38, %v40
    %v43 = vadd.f32 %v28, 1e-05
    %v44 = vadd.f32 %v31, 1e-05
    %v45 = vsub.f32 %v43, %v23
    %v46 = vsub.f32 %v44, %v24
    %v47 = vsub.f32 0.0, %v23
    %v48 = vsub.f32 0.0, %v24
    %v49 = vsel %vm41, %v45, %v47
    %v50 = vsel %vm42, %v46, %v48
    %51 = vst.msk [vmem:[#allocation5] sm:$0xff] %vm25, %v49
    %52 = vst.msk [vmem:[#allocation5 + $0x8] sm:$0xff] %vm25, %v50
    // Predicated region
    $region10: #{tpu_custom_call.1} parent=1 // pred_check
      _
    $region11: #{tpu_custom_call.1} parent=1 // pred_check_branch
      %54 = sbr.rel (0) target = $region13
    $region12: #{tpu_custom_call.1} parent=1 // pred_region
      %s56 = ssub.s32 256, 256
      %57 = vsyncadd [#allocation4], %s56
      %s58 = sshll.u32 [#allocation5], 4
      %s59 = int_to_ptr.vmem [resolvable:$true] %s58
      %64 = dma.vmem_to_hbm [thread:$0]  %s59, 256, %s1, [#allocation4], 128, 128, 8
    $region13: #{tpu_custom_call.1} parent=1 // pred_fallthru
      _
    // Predicated region
    $region14: #{tpu_custom_call.1} parent=1 // pred_check
      _
    $region15: #{tpu_custom_call.1} parent=1 // pred_check_branch
      %66 = sbr.rel (0) target = $region17
    $region16: #{tpu_custom_call.1} parent=1 // pred_region
      %67 = dma.done [#allocation4], 256
    $region17: #{tpu_custom_call.1} parent=1 // pred_fallthru
      _
    %68 = vsyncpa [#allocation3], 1
    %69 = vsyncpa [#allocation4], 1

</llo_original>
